<compile_context>
chip_gen: v6e
topology: v6e:2x2x1
jax: 0.10.0
libtpu: 0.0.40
codegen_flags: <defaults>
</compile_context>

<pallas_src>
import functools

import jax
import jax.numpy as jnp
import numpy as np
from jax.experimental import pallas as pl
from jax.experimental.pallas import tpu as pltpu
from jax.scipy.special import ndtr

# Module "parameters" (deterministic, from __init__ defaults).
MARGIN = 0.0
VAR_PRIOR = 1.0 / 32.0
KL_SCALE_FACTOR = 1e-6
DISTRIBUTION = "gauss"


def _round_up(x, m):
    return ((x + m - 1) // m) * m


def _vmem_limit_bytes():
    """Generation-aware scoped-VMEM limit (v7x has 64 MiB/TC, v5e/v6e 128 MiB)."""
    cap = None
    try:
        cap = int(pltpu.get_tpu_info().vmem_capacity_bytes)
    except Exception:
        cap = None
    if cap is None:
        cap = 128 * 1024 * 1024
    if cap <= 64 * 1024 * 1024:          # v7x-class
        return 44 * 1024 * 1024
    return 96 * 1024 * 1024              # v5e / v6e


def _pick_tile_n(n, d, vmem_limit):
    """Rows per tile.

    Per tile row we budget: 6 inputs x 2 pipeline buffers x D x 4B plus ~8 live
    (T, D) f32 temporaries, with 25% headroom inside the scoped VMEM limit.
    Capped at 1024 rows (mem-bound roofline already ~86% there) and so that the
    grid has >= 4 steps whenever N allows it (v7x megacore).
    """
    bytes_per_row = (6 * 2 + 8) * d * 4
    t = (int(0.75 * vmem_limit) // max(bytes_per_row, 1))
    t = max(8, min(1024, (t // 8) * 8))
    quarter = max(8, ((-(-n // 4)) // 8) * 8)   # ceil(n/4) floored to x8, min 8
    t = min(t, quarter)
    t = min(t, max(8, _round_up(n, 8)))
    return max(8, t)


def _btl_kernel(muA_ref, muP_ref, muN_ref, varA_ref, varP_ref, varN_ref,
                mu_ref, sigma_ref, klq_ref, kllog_ref,
                *, n_rows, tile_rows, ragged):
    muA = muA_ref[...]            # (T, D) f32
    muP = muP_ref[...]
    muN = muN_ref[...]
    varA = varA_ref[...]
    varP = varP_ref[...]
    varN = varN_ref[...]

    # --- elementwise (VPU); constants/recombines are deferred to (T, 1) rows ---
    muA2 = muA * muA
    muP2 = muP * muP
    muN2 = muN * muN
    dP = muP - muA
    dN = muN - muA
    dP2 = dP * dP
    dN2 = dN * dN

    # T1/2 and T2/2 in an all-non-negative form (no f32 cancellation):
    #   T1/2 = varP*(0.5*varP + dP^2 + varA) + muP^2*varA
    tPh = varP * (0.5 * varP + dP2 + varA) + muP2 * varA
    tNh = varN * (0.5 * varN + dN2 + varA) + muN2 * varA
    cross = (muP * muN) * varA

    # --- lane reductions (axis=1, XLU-cheap); scalar factors applied per row ---
    def rsum(x):
        return jnp.sum(x, axis=1, keepdims=True)   # (T, 1)

    s_varA, s_varP, s_varN = rsum(varA), rsum(varP), rsum(varN)
    s_muA2, s_muP2, s_muN2 = rsum(muA2), rsum(muP2), rsum(muN2)
    s_dP2, s_dN2 = rsum(dP2), rsum(dN2)
    s_tPh, s_tNh, s_cross = rsum(tPh), rsum(tNh), rsum(cross)
    s_logA = rsum(jnp.log(varA))
    s_logP = rsum(jnp.log(varP))
    s_logN = rsum(jnp.log(varN))

    # mu      = sum_D[(dP^2 + varP) - (dN^2 + varN)]          (muA^2 cancels)
    # sigma^2 = sum_D[2*T1 + 2*T2 - 2*T3] = 4*(S_tPh + S_tNh) - 8*S_cross
    mu = (s_dP2 + s_varP) - (s_dN2 + s_varN)
    sigma2 = 4.0 * (s_tPh + s_tNh) - 8.0 * s_cross
    klq = (s_varA + s_varP + s_varN) + (s_muA2 + s_muP2 + s_muN2)
    kllog = s_logA + s_logP + s_logN

    if ragged:
        # Mask rows past N in the (partial) final block so garbage never emits
        # NaN; the OOB portion of the store is discarded by Pallas anyway.
        row = (pl.program_id(0) * tile_rows
               + jax.lax.broadcasted_iota(jnp.int32, mu.shape, 0))
        valid = row < n_rows
        mu = jnp.where(valid, mu, 0.0)
        sigma2 = jnp.where(valid, sigma2, 0.0)
        klq = jnp.where(valid, klq, 0.0)
        kllog = jnp.where(valid, kllog, 0.0)

    mu_ref[...] = mu
    sigma_ref[...] = jnp.sqrt(jnp.maximum(sigma2, 0.0))
    klq_ref[...] = klq
    kllog_ref[...] = kllog


def bayesian_triplet_multiple_loss(muA, muP, muN, varA, varP, varN,
                                   margin=MARGIN,
                                   var_prior=VAR_PRIOR,
                                   kl_scale_factor=KL_SCALE_FACTOR,
                                   tile_n=None):
    muA = jnp.asarray(muA, jnp.float32)
    muP = jnp.asarray(muP, jnp.float32)
    muN = jnp.asarray(muN, jnp.float32)
    varA = jnp.asarray(varA, jnp.float32)
    varP = jnp.asarray(varP, jnp.float32)
    varN = jnp.asarray(varN, jnp.float32)

    N, D = muA.shape
    vmem_limit = _vmem_limit_bytes()
    if tile_n is None:
        tile_n = _pick_tile_n(N, D, vmem_limit)
    tile_n = max(8, (int(tile_n) // 8) * 8)

    num_tiles = pl.cdiv(N, tile_n)
    ragged = (N % tile_n) != 0

    in_spec = pl.BlockSpec((tile_n, D), lambda i: (i, 0))
    out_spec = pl.BlockSpec((tile_n, 1), lambda i: (i, 0))
    out_shape = jax.ShapeDtypeStruct((N, 1), jnp.float32)

    kernel = functools.partial(_btl_kernel, n_rows=N, tile_rows=tile_n,
                               ragged=ragged)

    mu_rows, sigma_rows, klq_rows, kllog_rows = pl.pallas_call(
        kernel,
        grid=(num_tiles,),
        in_specs=[in_spec] * 6,
        out_specs=(out_spec, out_spec, out_spec, out_spec),
        out_shape=(out_shape, out_shape, out_shape, out_shape),
        compiler_params=pltpu.CompilerParams(
            dimension_semantics=("parallel",),
            vmem_limit_bytes=vmem_limit),
    )(muA, muP, muN, varA, varP, varN)

    mu = mu_rows[:, 0]
    sigma = sigma_rows[:, 0]
    klq = klq_rows[:, 0]      # sum_D (var + mu^2) over the A, P, N heads
    kllog = kllog_rows[:, 0]  # sum_D log(var)     over the A, P, N heads

    # kl_div_gauss(mu_q, var_q, 0, var_p).mean() summed over the three heads:
    #   = 0.5 * mean_row[ klq/var_p - kllog ] + 3 * 0.5 * D * (log var_p - 1)
    # var_prior is applied HERE (not baked into the kernel), so the kwarg is honored.
    kl = (0.5 * (jnp.mean(klq) / var_prior - jnp.mean(kllog))
          + 1.5 * D * (jnp.log(var_prior) - 1.0))

    # Normal(loc=mu, scale=sigma + 1e-8).cdf(margin)
    probs = ndtr((margin - mu) / (sigma + 1e-8))
    nll = -jnp.log(probs + 1e-8)

    loss = jnp.mean(nll) + kl_scale_factor * kl
    return loss, jnp.mean(probs), jnp.mean(mu), jnp.mean(sigma)


def _reference_forward(muA, muP, muN, varA, varP, varN,
                       margin=MARGIN, var_prior=VAR_PRIOR,
                       kl_scale_factor=KL_SCALE_FACTOR):
    """Pure-JAX mirror of the PyTorch module (works in the transposed (D,N) view)."""
    muA, muP, muN, varA, varP, varN = (a.T for a in (muA, muP, muN, varA, varP, varN))
    mu = jnp.sum(muP**2 + varP - muN**2 - varN - 2 * muA * (muP - muN), axis=0)
    T1 = (varP**2 + 2 * muP**2 * varP + 2 * (varA + muA**2) * (varP + muP**2)
          - 2 * muA**2 * muP**2 - 4 * muA * muP * varP)
    T2 = (varN**2 + 2 * muN**2 * varN + 2 * (varA + muA**2) * (varN + muN**2)
          - 2 * muA**2 * muN**2 - 4 * muA * muN * varN)
    T3 = 4 * muP * muN * varA
    sigma2 = jnp.sum(2 * T1 + 2 * T2 - 2 * T3, axis=0)
    sigma = jnp.sqrt(sigma2)
    probs = ndtr((margin - mu) / (sigma + 1e-8))
    nll = -jnp.log(probs + 1e-8)

    def kl_gauss(mu_q, var_q):
        D = mu_q.shape[0]
        s = jnp.sum(mu_q**2, axis=0)
        kl = 0.5 * (var_q / var_prior * D + (1.0 / var_prior) * s - D
                    + D * (jnp.log(var_prior) - jnp.log(var_q)))
        return jnp.mean(kl)

    kl = kl_gauss(muA, varA) + kl_gauss(muP, varP) + kl_gauss(muN, varN)
    return (jnp.mean(nll) + kl_scale_factor * kl,
            jnp.mean(probs), jnp.mean(mu), jnp.mean(sigma))


def _make_inputs(key, N, D):
    k_mu, k_var = jax.random.split(key)
    kA, kP, kN = jax.random.split(k_mu, 3)
    kvA, kvP, kvN = jax.random.split(k_var, 3)
    muA = jax.random.normal(kA, (N, D), dtype=jnp.float32) * 0.5
    muP = jax.random.normal(kP, (N, D), dtype=jnp.float32) * 0.5
    muN = jax.random.normal(kN, (N, D), dtype=jnp.float32) * 0.5
    varA = jax.random.uniform(kvA, (N, D), dtype=jnp.float32, minval=0.05, maxval=0.5)
    varP = jax.random.uniform(kvP, (N, D), dtype=jnp.float32, minval=0.05, maxval=0.5)
    varN = jax.random.uniform(kvN, (N, D), dtype=jnp.float32, minval=0.05, maxval=0.5)
    return muA, muP, muN, varA, varP, varN


if __name__ == "__main__":
    key = jax.random.PRNGKey(0)
    k1, k2 = jax.random.split(key)

    # Case 1: small, single tile (N=8 triplets, D=32 embedding dim), defaults.
    args1 = _make_inputs(k1, 8, 32)
    out1 = jax.block_until_ready(bayesian_triplet_multiple_loss(*args1))
    ref1 = _reference_forward(*args1)
    for o, r in zip(out1, ref1):
        np.testing.assert_allclose(np.asarray(o), np.asarray(r), rtol=5e-4, atol=1e-4)

    # Case 2: ragged N (no host padding; partial final block + in-kernel row mask),
    # multiple tiles, "parallel" grid, and NON-default var_prior / kl_scale_factor
    # to exercise the fixed kwarg handling.
    args2 = _make_inputs(k2, 37, 128)
    out2 = jax.block_until_ready(
        bayesian_triplet_multiple_loss(*args2, var_prior=0.1,
                                       kl_scale_factor=1e-3, tile_n=16))
    ref2 = _reference_forward(*args2, var_prior=0.1, kl_scale_factor=1e-3)
    for o, r in zip(out2, ref2):
        np.testing.assert_allclose(np.asarray(o), np.asarray(r), rtol=5e-4, atol=1e-4)

    # Case 3: auto tile selection, N a multiple of 8 but not of the tile (grid >= 4).
    args3 = _make_inputs(key, 64, 64)
    out3 = jax.block_until_ready(bayesian_triplet_multiple_loss(*args3))
    ref3 = _reference_forward(*args3)
    for o, r in zip(out3, ref3):
        np.testing.assert_allclose(np.asarray(o), np.asarray(r), rtol=5e-4, atol=1e-4)

    print("KERNEL_OK")
</pallas_src>

<mosaic_0001>
module attributes {stable_mosaic.version = 11 : i64} {
  func.func @_btl_kernel(%arg0: i32, %arg1: memref<8x32xf32, #tpu.memory_space<vmem>>, %arg2: memref<8x32xf32, #tpu.memory_space<vmem>>, %arg3: memref<8x32xf32, #tpu.memory_space<vmem>>, %arg4: memref<8x32xf32, #tpu.memory_space<vmem>>, %arg5: memref<8x32xf32, #tpu.memory_space<vmem>>, %arg6: memref<8x32xf32, #tpu.memory_space<vmem>>, %arg7: memref<8x1xf32, #tpu.memory_space<vmem>>, %arg8: memref<8x1xf32, #tpu.memory_space<vmem>>, %arg9: memref<8x1xf32, #tpu.memory_space<vmem>>, %arg10: memref<8x1xf32, #tpu.memory_space<vmem>>) attributes {dimension_semantics = [#tpu.dimension_semantics<parallel>], iteration_bounds = array<i64: 1>, scalar_prefetch = 0 : i64, scratch_operands = 0 : i64, tpu.core_type = #tpu.core_type<tc>, window_params = [{transform_indices = @transform_0, window_bounds = array<i64: 8, 32>}, {transform_indices = @transform_1, window_bounds = array<i64: 8, 32>}, {transform_indices = @transform_2, window_bounds = array<i64: 8, 32>}, {transform_indices = @transform_3, window_bounds = array<i64: 8, 32>}, {transform_indices = @transform_4, window_bounds = array<i64: 8, 32>}, {transform_indices = @transform_5, window_bounds = array<i64: 8, 32>}, {transform_indices = @transform_6, window_bounds = array<i64: 8, 1>}, {transform_indices = @transform_7, window_bounds = array<i64: 8, 1>}, {transform_indices = @transform_8, window_bounds = array<i64: 8, 1>}, {transform_indices = @transform_9, window_bounds = array<i64: 8, 1>}]} {
    %c0 = arith.constant 0 : index
    %c0_0 = arith.constant 0 : index
    %0 = vector.load %arg1[%c0, %c0_0] : memref<8x32xf32, #tpu.memory_space<vmem>>, vector<8x32xf32>
    %c0_1 = arith.constant 0 : index
    %c0_2 = arith.constant 0 : index
    %1 = vector.load %arg2[%c0_1, %c0_2] : memref<8x32xf32, #tpu.memory_space<vmem>>, vector<8x32xf32>
    %c0_3 = arith.constant 0 : index
    %c0_4 = arith.constant 0 : index
    %2 = vector.load %arg3[%c0_3, %c0_4] : memref<8x32xf32, #tpu.memory_space<vmem>>, vector<8x32xf32>
    %c0_5 = arith.constant 0 : index
    %c0_6 = arith.constant 0 : index
    %3 = vector.load %arg4[%c0_5, %c0_6] : memref<8x32xf32, #tpu.memory_space<vmem>>, vector<8x32xf32>
    %c0_7 = arith.constant 0 : index
    %c0_8 = arith.constant 0 : index
    %4 = vector.load %arg5[%c0_7, %c0_8] : memref<8x32xf32, #tpu.memory_space<vmem>>, vector<8x32xf32>
    %c0_9 = arith.constant 0 : index
    %c0_10 = arith.constant 0 : index
    %5 = vector.load %arg6[%c0_9, %c0_10] : memref<8x32xf32, #tpu.memory_space<vmem>>, vector<8x32xf32>
    %6 = arith.mulf %0, %0 : vector<8x32xf32>
    %7 = arith.mulf %1, %1 : vector<8x32xf32>
    %8 = arith.mulf %2, %2 : vector<8x32xf32>
    %9 = arith.subf %1, %0 : vector<8x32xf32>
    %10 = arith.subf %2, %0 : vector<8x32xf32>
    %11 = arith.mulf %9, %9 : vector<8x32xf32>
    %12 = arith.mulf %10, %10 : vector<8x32xf32>
    %cst = arith.constant 5.000000e-01 : f32
    %13 = vector.broadcast %cst : f32 to vector<8x32xf32>
    %14 = arith.mulf %13, %4 : vector<8x32xf32>
    %15 = arith.addf %14, %11 : vector<8x32xf32>
    %16 = arith.addf %15, %3 : vector<8x32xf32>
    %17 = arith.mulf %4, %16 : vector<8x32xf32>
    %18 = arith.mulf %7, %3 : vector<8x32xf32>
    %19 = arith.addf %17, %18 : vector<8x32xf32>
    %cst_11 = arith.constant 5.000000e-01 : f32
    %20 = vector.broadcast %cst_11 : f32 to vector<8x32xf32>
    %21 = arith.mulf %20, %5 : vector<8x32xf32>
    %22 = arith.addf %21, %12 : vector<8x32xf32>
    %23 = arith.addf %22, %3 : vector<8x32xf32>
    %24 = arith.mulf %5, %23 : vector<8x32xf32>
    %25 = arith.mulf %8, %3 : vector<8x32xf32>
    %26 = arith.addf %24, %25 : vector<8x32xf32>
    %27 = arith.mulf %1, %2 : vector<8x32xf32>
    %28 = arith.mulf %27, %3 : vector<8x32xf32>
    %cst_12 = arith.constant dense<0.000000e+00> : vector<8xf32>
    %29 = vector.multi_reduction <add>, %3, %cst_12 [1] : vector<8x32xf32> to vector<8xf32>
    %30 = vector.shape_cast %29 : vector<8xf32> to vector<8x1xf32>
    %cst_13 = arith.constant dense<0.000000e+00> : vector<8xf32>
    %31 = vector.multi_reduction <add>, %4, %cst_13 [1] : vector<8x32xf32> to vector<8xf32>
    %32 = vector.shape_cast %31 : vector<8xf32> to vector<8x1xf32>
    %cst_14 = arith.constant dense<0.000000e+00> : vector<8xf32>
    %33 = vector.multi_reduction <add>, %5, %cst_14 [1] : vector<8x32xf32> to vector<8xf32>
    %34 = vector.shape_cast %33 : vector<8xf32> to vector<8x1xf32>
    %cst_15 = arith.constant dense<0.000000e+00> : vector<8xf32>
    %35 = vector.multi_reduction <add>, %6, %cst_15 [1] : vector<8x32xf32> to vector<8xf32>
    %36 = vector.shape_cast %35 : vector<8xf32> to vector<8x1xf32>
    %cst_16 = arith.constant dense<0.000000e+00> : vector<8xf32>
    %37 = vector.multi_reduction <add>, %7, %cst_16 [1] : vector<8x32xf32> to vector<8xf32>
    %38 = vector.shape_cast %37 : vector<8xf32> to vector<8x1xf32>
    %cst_17 = arith.constant dense<0.000000e+00> : vector<8xf32>
    %39 = vector.multi_reduction <add>, %8, %cst_17 [1] : vector<8x32xf32> to vector<8xf32>
    %40 = vector.shape_cast %39 : vector<8xf32> to vector<8x1xf32>
    %cst_18 = arith.constant dense<0.000000e+00> : vector<8xf32>
    %41 = vector.multi_reduction <add>, %11, %cst_18 [1] : vector<8x32xf32> to vector<8xf32>
    %42 = vector.shape_cast %41 : vector<8xf32> to vector<8x1xf32>
    %cst_19 = arith.constant dense<0.000000e+00> : vector<8xf32>
    %43 = vector.multi_reduction <add>, %12, %cst_19 [1] : vector<8x32xf32> to vector<8xf32>
    %44 = vector.shape_cast %43 : vector<8xf32> to vector<8x1xf32>
    %cst_20 = arith.constant dense<0.000000e+00> : vector<8xf32>
    %45 = vector.multi_reduction <add>, %19, %cst_20 [1] : vector<8x32xf32> to vector<8xf32>
    %46 = vector.shape_cast %45 : vector<8xf32> to vector<8x1xf32>
    %cst_21 = arith.constant dense<0.000000e+00> : vector<8xf32>
    %47 = vector.multi_reduction <add>, %26, %cst_21 [1] : vector<8x32xf32> to vector<8xf32>
    %48 = vector.shape_cast %47 : vector<8xf32> to vector<8x1xf32>
    %cst_22 = arith.constant dense<0.000000e+00> : vector<8xf32>
    %49 = vector.multi_reduction <add>, %28, %cst_22 [1] : vector<8x32xf32> to vector<8xf32>
    %50 = vector.shape_cast %49 : vector<8xf32> to vector<8x1xf32>
    %51 = math.log %3 : vector<8x32xf32>
    %cst_23 = arith.constant dense<0.000000e+00> : vector<8xf32>
    %52 = vector.multi_reduction <add>, %51, %cst_23 [1] : vector<8x32xf32> to vector<8xf32>
    %53 = vector.shape_cast %52 : vector<8xf32> to vector<8x1xf32>
    %54 = math.log %4 : vector<8x32xf32>
    %cst_24 = arith.constant dense<0.000000e+00> : vector<8xf32>
    %55 = vector.multi_reduction <add>, %54, %cst_24 [1] : vector<8x32xf32> to vector<8xf32>
    %56 = vector.shape_cast %55 : vector<8xf32> to vector<8x1xf32>
    %57 = math.log %5 : vector<8x32xf32>
    %cst_25 = arith.constant dense<0.000000e+00> : vector<8xf32>
    %58 = vector.multi_reduction <add>, %57, %cst_25 [1] : vector<8x32xf32> to vector<8xf32>
    %59 = vector.shape_cast %58 : vector<8xf32> to vector<8x1xf32>
    %60 = arith.addf %42, %32 : vector<8x1xf32>
    %61 = arith.addf %44, %34 : vector<8x1xf32>
    %62 = arith.subf %60, %61 : vector<8x1xf32>
    %63 = arith.addf %46, %48 : vector<8x1xf32>
    %cst_26 = arith.constant 4.000000e+00 : f32
    %64 = vector.broadcast %cst_26 : f32 to vector<8x1xf32>
    %65 = arith.mulf %64, %63 : vector<8x1xf32>
    %cst_27 = arith.constant 8.000000e+00 : f32
    %66 = vector.broadcast %cst_27 : f32 to vector<8x1xf32>
    %67 = arith.mulf %66, %50 : vector<8x1xf32>
    %68 = arith.subf %65, %67 : vector<8x1xf32>
    %69 = arith.addf %30, %32 : vector<8x1xf32>
    %70 = arith.addf %69, %34 : vector<8x1xf32>
    %71 = arith.addf %36, %38 : vector<8x1xf32>
    %72 = arith.addf %71, %40 : vector<8x1xf32>
    %73 = arith.addf %70, %72 : vector<8x1xf32>
    %74 = arith.addf %53, %56 : vector<8x1xf32>
    %75 = arith.addf %74, %59 : vector<8x1xf32>
    %c0_28 = arith.constant 0 : index
    %c0_29 = arith.constant 0 : index
    %76 = vector.load %arg7[%c0_28, %c0_29] : memref<8x1xf32, #tpu.memory_space<vmem>>, vector<8x1xf32>
    tpu.vector_store %arg7[%c0_28, %c0_29], %62 {strides = array<i32>} : memref<8x1xf32, #tpu.memory_space<vmem>>, vector<8x1xf32>,
    %cst_30 = arith.constant 0.000000e+00 : f32
    %77 = vector.broadcast %cst_30 : f32 to vector<8x1xf32>
    %78 = arith.maximumf %68, %77 : vector<8x1xf32>
    %79 = math.sqrt %78 : vector<8x1xf32>
    %c0_31 = arith.constant 0 : index
    %c0_32 = arith.constant 0 : index
    %80 = vector.load %arg8[%c0_31, %c0_32] : memref<8x1xf32, #tpu.memory_space<vmem>>, vector<8x1xf32>
    tpu.vector_store %arg8[%c0_31, %c0_32], %79 {strides = array<i32>} : memref<8x1xf32, #tpu.memory_space<vmem>>, vector<8x1xf32>,
    %c0_33 = arith.constant 0 : index
    %c0_34 = arith.constant 0 : index
    %81 = vector.load %arg9[%c0_33, %c0_34] : memref<8x1xf32, #tpu.memory_space<vmem>>, vector<8x1xf32>
    tpu.vector_store %arg9[%c0_33, %c0_34], %73 {strides = array<i32>} : memref<8x1xf32, #tpu.memory_space<vmem>>, vector<8x1xf32>,
    %c0_35 = arith.constant 0 : index
    %c0_36 = arith.constant 0 : index
    %82 = vector.load %arg10[%c0_35, %c0_36] : memref<8x1xf32, #tpu.memory_space<vmem>>, vector<8x1xf32>
    tpu.vector_store %arg10[%c0_35, %c0_36], %75 {strides = array<i32>} : memref<8x1xf32, #tpu.memory_space<vmem>>, vector<8x1xf32>,
    return
  }
  func.func @transform_0(%arg0: i32) -> (i32, i32) {
    %c0_i32 = arith.constant 0 : i32
    %c0_i32_0 = arith.constant 0 : i32
    return %arg0, %c0_i32 : i32, i32
  }
  func.func @transform_1(%arg0: i32) -> (i32, i32) {
    %c0_i32 = arith.constant 0 : i32
    %c0_i32_0 = arith.constant 0 : i32
    return %arg0, %c0_i32 : i32, i32
  }
  func.func @transform_2(%arg0: i32) -> (i32, i32) {
    %c0_i32 = arith.constant 0 : i32
    %c0_i32_0 = arith.constant 0 : i32
    return %arg0, %c0_i32 : i32, i32
  }
  func.func @transform_3(%arg0: i32) -> (i32, i32) {
    %c0_i32 = arith.constant 0 : i32
    %c0_i32_0 = arith.constant 0 : i32
    return %arg0, %c0_i32 : i32, i32
  }
  func.func @transform_4(%arg0: i32) -> (i32, i32) {
    %c0_i32 = arith.constant 0 : i32
    %c0_i32_0 = arith.constant 0 : i32
    return %arg0, %c0_i32 : i32, i32
  }
  func.func @transform_5(%arg0: i32) -> (i32, i32) {
    %c0_i32 = arith.constant 0 : i32
    %c0_i32_0 = arith.constant 0 : i32
    return %arg0, %c0_i32 : i32, i32
  }
  func.func @transform_6(%arg0: i32) -> (i32, i32) {
    %c0_i32 = arith.constant 0 : i32
    %c0_i32_0 = arith.constant 0 : i32
    return %arg0, %c0_i32 : i32, i32
  }
  func.func @transform_7(%arg0: i32) -> (i32, i32) {
    %c0_i32 = arith.constant 0 : i32
    %c0_i32_0 = arith.constant 0 : i32
    return %arg0, %c0_i32 : i32, i32
  }
  func.func @transform_8(%arg0: i32) -> (i32, i32) {
    %c0_i32 = arith.constant 0 : i32
    %c0_i32_0 = arith.constant 0 : i32
    return %arg0, %c0_i32 : i32, i32
  }
  func.func @transform_9(%arg0: i32) -> (i32, i32) {
    %c0_i32 = arith.constant 0 : i32
    %c0_i32_0 = arith.constant 0 : i32
    return %arg0, %c0_i32 : i32, i32
  }
}

</mosaic_0001>

<llo_original>
// kernel: tpu_custom_call.1
$region0: #{tpu_custom_call.1}
  #allocation0 [shape = 'u32[]', space=smem, size = 0x4, offset = 0x4, fixed_abs, tag = 'smem constant byte address 0x4 - core index']
  #allocation1 [shape = 'u32[144,128]{1,0:T(1,128)}', space=vmem, size = 0x12000, scoped, tag = 'internal scratch']
  %s0 = inlined_call_operand.hbm [shape: f32[8,32], index: 0, kind: input, shape index: {}]
  %s1 = inlined_call_operand.hbm [shape: f32[8,32], index: 1, kind: input, shape index: {}]
  %s2 = inlined_call_operand.hbm [shape: f32[8,32], index: 2, kind: input, shape index: {}]
  %s3 = inlined_call_operand.hbm [shape: f32[8,32], index: 3, kind: input, shape index: {}]
  %s4 = inlined_call_operand.hbm [shape: f32[8,32], index: 4, kind: input, shape index: {}]
  %s5 = inlined_call_operand.vmem [shape: f32[8,32], index: 5, kind: input, shape index: {}]
  %s6 = inlined_call_operand.vmem [shape: f32[8,1], index: 6, kind: output, shape index: {0}]
  %s7 = inlined_call_operand.vmem [shape: f32[8,1], index: 7, kind: output, shape index: {1}]
  %s8 = inlined_call_operand.vmem [shape: f32[8,1], index: 8, kind: output, shape index: {2}]
  %s9 = inlined_call_operand.vmem [shape: f32[8,1], index: 9, kind: output, shape index: {3}]
  %10 = xla_tuple %s6, %s7, %s8, %s9
  %s11 = sld [smem:[#allocation0]]
  $region78: #{tpu_custom_call.1} parent=0
    _
  %s13 = ssub.s32 1, %s11
  %s14 = scalar_select 0, %s13, %s11
  $region1: #{tpu_custom_call.1} parent=0
    #allocation2 [shape = 'u8[4096]{0}', space=vmem, size = 0x1000, scoped, tag = 'input window, operand 0, single buffered']
    #allocation3 [shape = 's32[1]{0}', space=sflag, size = 0x4, scoped, tag = 'scoped memory for tpu_custom_call.1']
    #allocation4 [shape = 'u8[4096]{0}', space=vmem, size = 0x1000, scoped, tag = 'input window, operand 1, single buffered']
    #allocation5 [shape = 's32[1]{0}', space=sflag, size = 0x4, scoped, tag = 'scoped memory for tpu_custom_call.1']
    #allocation6 [shape = 'u8[4096]{0}', space=vmem, size = 0x1000, scoped, tag = 'input window, operand 2, single buffered']
    #allocation7 [shape = 'u8[4096]{0}', space=vmem, size = 0x1000, scoped, tag = 'input window, operand 3, single buffered']
    #allocation8 [shape = 's32[1]{0}', space=sflag, size = 0x4, scoped, tag = 'scoped memory for tpu_custom_call.1']
    #allocation9 [shape = 'u8[4096]{0}', space=vmem, size = 0x1000, scoped, tag = 'input window, operand 4, single buffered']
    %15 = vsyncpa [#allocation3], 0
    %16 = vsyncpa [#allocation5], 0
    %17 = vsyncpa [#allocation8], 0
    // Predicated region
    $region2: #{tpu_custom_call.1} parent=1 // pred_check
      _
    $region3: #{tpu_custom_call.1} parent=1 // pred_check_branch
      %19 = sbr.rel (0) target = $region5
    $region4: #{tpu_custom_call.1} parent=1 // pred_region
      %s21 = ssub.s32 128, 128
      %22 = vsyncadd [#allocation3], %s21
      %s24 = sshll.u32 [#allocation2], 4
      %s25 = int_to_ptr.vmem [resolvable:$true] %s24
      %27 = dma.hbm_to_vmem [thread:$0]  %s0, 128, %s25, [#allocation3]
    $region5: #{tpu_custom_call.1} parent=1 // pred_fallthru
      _
    // Predicated region
    $region6: #{tpu_custom_call.1} parent=1 // pred_check
      _
    $region7: #{tpu_custom_call.1} parent=1 // pred_check_branch
      %29 = sbr.rel (0) target = $region9
    $region8: #{tpu_custom_call.1} parent=1 // pred_region
      %s31 = ssub.s32 128, 128
      %32 = vsyncadd [#allocation5], %s31
      %s34 = sshll.u32 [#allocation4], 4
      %s35 = int_to_ptr.vmem [resolvable:$true] %s34
      %37 = dma.hbm_to_vmem [thread:$0]  %s1, 128, %s35, [#allocation5]
    $region9: #{tpu_custom_call.1} parent=1 // pred_fallthru
      _
    // Predicated region
    $region10: #{tpu_custom_call.1} parent=1 // pred_check
      _
    $region11: #{tpu_custom_call.1} parent=1 // pred_check_branch
      %39 = sbr.rel (0) target = $region13
    $region12: #{tpu_custom_call.1} parent=1 // pred_region
      %s41 = ssub.s32 128, 128
      %42 = vsyncadd [#allocation5], %s41
      %s44 = sshll.u32 [#allocation6], 4
      %s45 = int_to_ptr.vmem [resolvable:$true] %s44
      %47 = dma.hbm_to_vmem [thread:$0]  %s2, 128, %s45, [#allocation5]
    $region13: #{tpu_custom_call.1} parent=1 // pred_fallthru
      _
    // Predicated region
    $region14: #{tpu_custom_call.1} parent=1 // pred_check
      _
    $region15: #{tpu_custom_call.1} parent=1 // pred_check_branch
      %49 = sbr.rel (0) target = $region17
    $region16: #{tpu_custom_call.1} parent=1 // pred_region
      %s51 = ssub.s32 128, 128
      %52 = vsyncadd [#allocation8], %s51
      %s54 = sshll.u32 [#allocation7], 4
      %s55 = int_to_ptr.vmem [resolvable:$true] %s54
      %57 = dma.hbm_to_vmem [thread:$0]  %s3, 128, %s55, [#allocation8]
    $region17: #{tpu_custom_call.1} parent=1 // pred_fallthru
      _
    // Predicated region
    $region18: #{tpu_custom_call.1} parent=1 // pred_check
      _
    $region19: #{tpu_custom_call.1} parent=1 // pred_check_branch
      %59 = sbr.rel (0) target = $region21
    $region20: #{tpu_custom_call.1} parent=1 // pred_region
      %s61 = ssub.s32 128, 128
      %62 = vsyncadd [#allocation8], %s61
      %s64 = sshll.u32 [#allocation9], 4
      %s65 = int_to_ptr.vmem [resolvable:$true] %s64
      %67 = dma.hbm_to_vmem [thread:$0]  %s4, 128, %s65, [#allocation8]
    $region21: #{tpu_custom_call.1} parent=1 // pred_fallthru
      _
    // Predicated region
    $region22: #{tpu_custom_call.1} parent=1 // pred_check
      _
    $region23: #{tpu_custom_call.1} parent=1 // pred_check_branch
      %69 = sbr.rel (0) target = $region25
    $region24: #{tpu_custom_call.1} parent=1 // pred_region
      _
    $region25: #{tpu_custom_call.1} parent=1 // pred_fallthru
      _
    // Predicated region
    $region26: #{tpu_custom_call.1} parent=1 // pred_check
      _
    $region27: #{tpu_custom_call.1} parent=1 // pred_check_branch
      %71 = sbr.rel (0) target = $region29
    $region28: #{tpu_custom_call.1} parent=1 // pred_region
      %72 = dma.done [#allocation3], 128
    $region29: #{tpu_custom_call.1} parent=1 // pred_fallthru
      _
    // Predicated region
    $region30: #{tpu_custom_call.1} parent=1 // pred_check
      _
    $region31: #{tpu_custom_call.1} parent=1 // pred_check_branch
      %74 = sbr.rel (0) target = $region33
    $region32: #{tpu_custom_call.1} parent=1 // pred_region
      %75 = dma.done [#allocation5], 128
    $region33: #{tpu_custom_call.1} parent=1 // pred_fallthru
      _
    // Predicated region
    $region34: #{tpu_custom_call.1} parent=1 // pred_check
      _
    $region35: #{tpu_custom_call.1} parent=1 // pred_check_branch
      %77 = sbr.rel (0) target = $region37
    $region36: #{tpu_custom_call.1} parent=1 // pred_region
      %78 = dma.done [#allocation5], 128
    $region37: #{tpu_custom_call.1} parent=1 // pred_fallthru
      _
    // Predicated region
    $region38: #{tpu_custom_call.1} parent=1 // pred_check
      _
    $region39: #{tpu_custom_call.1} parent=1 // pred_check_branch
      %80 = sbr.rel (0) target = $region41
    $region40: #{tpu_custom_call.1} parent=1 // pred_region
      %81 = dma.done [#allocation8], 128
    $region41: #{tpu_custom_call.1} parent=1 // pred_fallthru
      _
    // Predicated region
    $region42: #{tpu_custom_call.1} parent=1 // pred_check
      _
    $region43: #{tpu_custom_call.1} parent=1 // pred_check_branch
      %83 = sbr.rel (0) target = $region45
    $region44: #{tpu_custom_call.1} parent=1 // pred_region
      %84 = dma.done [#allocation8], 128
    $region45: #{tpu_custom_call.1} parent=1 // pred_fallthru
      _
    %v85 = vld [vmem:[#allocation2] sm:$0xff]
    %v86 = vld [vmem:[#allocation4] sm:$0xff]
    %v87 = vld [vmem:[#allocation6] sm:$0xff]
    %v88 = vld [vmem:[#allocation7] sm:$0xff]
    %v89 = vld [vmem:[#allocation9] sm:$0xff]
    %v90 = vld [vmem:[%s5] sm:$0xff]
    %v91 = vmul.f32 %v85, %v85
    %v92 = vmul.f32 %v86, %v86
    %v93 = vmul.f32 %v87, %v87
    %v94 = vsub.f32 %v86, %v85
    %v95 = vsub.f32 %v87, %v85
    %v96 = vmul.f32 %v94, %v94
    %v97 = vmul.f32 %v95, %v95
    %v98 = vmul.f32 %v89, 0.5
    %v99 = vadd.f32 %v98, %v96
    %v100 = vadd.f32 %v99, %v88
    %v101 = vmul.f32 %v89, %v100
    %v102 = vmul.f32 %v92, %v88
    %v103 = vadd.f32 %v101, %v102
    %v104 = vmul.f32 %v90, 0.5
    %v105 = vadd.f32 %v104, %v97
    %v106 = vadd.f32 %v105, %v88
    %v107 = vmul.f32 %v90, %v106
    %v108 = vmul.f32 %v93, %v88
    %v109 = vadd.f32 %v107, %v108
    %v110 = vmul.f32 %v86, %v87
    %v111 = vmul.f32 %v110, %v88
    %vm112 = vcmask 261120
    %v113 = vsel %vm112, %v88, 0.0
    %114 = vadd.xlane.f32.xlu0 %v113
    %v115 = vpop.xlane.xlu0 %114
    %v116 = vsel %vm112, %v89, 0.0
    %117 = vadd.xlane.f32.xlu0 %v116
    %v118 = vpop.xlane.xlu0 %117
    %v119 = vsel %vm112, %v90, 0.0
    %120 = vadd.xlane.f32.xlu0 %v119
    %v121 = vpop.xlane.xlu0 %120
    %v122 = vsel %vm112, %v91, 0.0
    %123 = vadd.xlane.f32.xlu0 %v122
    %v124 = vpop.xlane.xlu0 %123
    %v125 = vsel %vm112, %v92, 0.0
    %126 = vadd.xlane.f32.xlu0 %v125
    %v127 = vpop.xlane.xlu0 %126
    %v128 = vsel %vm112, %v93, 0.0
    %129 = vadd.xlane.f32.xlu0 %v128
    %v130 = vpop.xlane.xlu0 %129
    %v131 = vsel %vm112, %v96, 0.0
    %132 = vadd.xlane.f32.xlu0 %v131
    %v133 = vpop.xlane.xlu0 %132
    %v134 = vsel %vm112, %v97, 0.0
    %135 = vadd.xlane.f32.xlu0 %v134
    %v136 = vpop.xlane.xlu0 %135
    %v137 = vsel %vm112, %v103, 0.0
    %138 = vadd.xlane.f32.xlu0 %v137
    %v139 = vpop.xlane.xlu0 %138
    %v140 = vsel %vm112, %v109, 0.0
    %141 = vadd.xlane.f32.xlu0 %v140
    %v142 = vpop.xlane.xlu0 %141
    %v143 = vsel %vm112, %v111, 0.0
    %144 = vadd.xlane.f32.xlu0 %v143
    %v145 = vpop.xlane.xlu0 %144
    %v146 = vlog2.pop %v88
    %v147 = vmul.f32 %v146, 0.6931472
    %v148 = vsel %vm112, %v147, 0.0
    %149 = vadd.xlane.f32.xlu0 %v148
    %v150 = vpop.xlane.xlu0 %149
    %v151 = vlog2.pop %v89
    %v152 = vmul.f32 %v151, 0.6931472
    %v153 = vsel %vm112, %v152, 0.0
    %154 = vadd.xlane.f32.xlu0 %v153
    %v155 = vpop.xlane.xlu0 %154
    %v156 = vlog2.pop %v90
    %v157 = vmul.f32 %v156, 0.6931472
    %v158 = vsel %vm112, %v157, 0.0
    %159 = vadd.xlane.f32.xlu0 %v158
    %v160 = vpop.xlane.xlu0 %159
    %v161 = vadd.f32 %v133, %v118
    %v162 = vadd.f32 %v136, %v121
    %v163 = vsub.f32 %v161, %v162
    %v164 = vadd.f32 %v139, %v142
    %v165 = vmul.f32 %v164, 4.0
    %v166 = vmul.f32 %v145, 8.0
    %v167 = vsub.f32 %v165, %v166
    %v168 = vadd.f32 %v115, %v118
    %v169 = vadd.f32 %v168, %v121
    %v170 = vadd.f32 %v124, %v127
    %v171 = vadd.f32 %v170, %v130
    %v172 = vadd.f32 %v169, %v171
    %v173 = vadd.f32 %v150, %v155
    %v174 = vadd.f32 %v173, %v160
    %vm175 = vcmask 7168
    %176 = vst.msk [vmem:[%s6] sm:$0xff] %vm175, %v163
    %v177 = vmax.f32 %v167, 0.0
    %v178 = vrsqrt.pop %v177
    %v179 = vmul.f32 %v177, %v178
    %vm180 = vcmp.eq.f32.partialorder %v177, inf
    %v181 = vsel %vm180, %v177, %v179
    %vm182 = vcmp.eq.f32.partialorder %v177, 0.0
    %v183 = vand.u32 %v177, 2147483648
    %v184 = vsel %vm182, %v183, %v181
    %185 = vst.msk [vmem:[%s7] sm:$0xff] %vm175, %v184
    %186 = vst.msk [vmem:[%s8] sm:$0xff] %vm175, %v172
    %187 = vst.msk [vmem:[%s9] sm:$0xff] %vm175, %v174
    // Predicated region
    $region46: #{tpu_custom_call.1} parent=1 // pred_check
      _
    $region47: #{tpu_custom_call.1} parent=1 // pred_check_branch
      %189 = sbr.rel (0) target = $region49
    $region48: #{tpu_custom_call.1} parent=1 // pred_region
      _
    $region49: #{tpu_custom_call.1} parent=1 // pred_fallthru
      _
    // Predicated region
    $region50: #{tpu_custom_call.1} parent=1 // pred_check
      _
    $region51: #{tpu_custom_call.1} parent=1 // pred_check_branch
      %191 = sbr.rel (0) target = $region53
    $region52: #{tpu_custom_call.1} parent=1 // pred_region
      _
    $region53: #{tpu_custom_call.1} parent=1 // pred_fallthru
      _
    // Predicated region
    $region54: #{tpu_custom_call.1} parent=1 // pred_check
      _
    $region55: #{tpu_custom_call.1} parent=1 // pred_check_branch
      %193 = sbr.rel (0) target = $region57
    $region56: #{tpu_custom_call.1} parent=1 // pred_region
      _
    $region57: #{tpu_custom_call.1} parent=1 // pred_fallthru
      _
    // Predicated region
    $region58: #{tpu_custom_call.1} parent=1 // pred_check
      _
    $region59: #{tpu_custom_call.1} parent=1 // pred_check_branch
      %195 = sbr.rel (0) target = $region61
    $region60: #{tpu_custom_call.1} parent=1 // pred_region
      _
    $region61: #{tpu_custom_call.1} parent=1 // pred_fallthru
      _
    // Predicated region
    $region62: #{tpu_custom_call.1} parent=1 // pred_check
      _
    $region63: #{tpu_custom_call.1} parent=1 // pred_check_branch
      %197 = sbr.rel (0) target = $region65
    $region64: #{tpu_custom_call.1} parent=1 // pred_region
      _
    $region65: #{tpu_custom_call.1} parent=1 // pred_fallthru
      _
    // Predicated region
    $region66: #{tpu_custom_call.1} parent=1 // pred_check
      _
    $region67: #{tpu_custom_call.1} parent=1 // pred_check_branch
      %199 = sbr.rel (0) target = $region69
    $region68: #{tpu_custom_call.1} parent=1 // pred_region
      _
    $region69: #{tpu_custom_call.1} parent=1 // pred_fallthru
      _
    // Predicated region
    $region70: #{tpu_custom_call.1} parent=1 // pred_check
      _
    $region71: #{tpu_custom_call.1} parent=1 // pred_check_branch
      %201 = sbr.rel (0) target = $region73
    $region72: #{tpu_custom_call.1} parent=1 // pred_region
      _
    $region73: #{tpu_custom_call.1} parent=1 // pred_fallthru
      _
    // Predicated region
    $region74: #{tpu_custom_call.1} parent=1 // pred_check
      _
    $region75: #{tpu_custom_call.1} parent=1 // pred_check_branch
      %203 = sbr.rel (0) target = $region77
    $region76: #{tpu_custom_call.1} parent=1 // pred_region
      _
    $region77: #{tpu_custom_call.1} parent=1 // pred_fallthru
      _
    %204 = vsyncpa [#allocation3], 1
    %205 = vsyncpa [#allocation5], 1
    %206 = vsyncpa [#allocation8], 1

</llo_original>
